<compile_context>
chip_gen: v7x
topology: tpu7x:2x2x1
jax: 0.10.0
libtpu: 0.0.40
codegen_flags: <defaults>
</compile_context>

<pallas_src>
import functools
from typing import Any, NamedTuple, Optional

import jax
import jax.numpy as jnp
from jax.experimental import pallas as pl
from jax.experimental.pallas import tpu as pltpu


# --------------------------------------------------------------------------------------
# Pallas kernel: one (i, j, k) grid step of  out = (x * (|x| > thr)) @ W^T + bias
# --------------------------------------------------------------------------------------
def _rsparse_matmul_kernel(thr_ref, x_ref, w_ref, b_ref, o_ref, acc_ref, *, compute_dtype):
    """thr_ref: SMEM (1,1) f32 | x_ref: VMEM (tm,tk) | w_ref: VMEM (tn,tk)
    b_ref: VMEM (1,tn) | o_ref: VMEM (tm,tn) | acc_ref: VMEM (tm,tn) f32 scratch."""
    k_idx = pl.program_id(2)

    thr = thr_ref[0, 0]
    x = x_ref[...]
    # Fused sparsification: single VPU select (no mask cast / extra multiply).
    x_sparse = jnp.where(jnp.abs(x) > thr, x, jnp.zeros_like(x))

    a = x_sparse.astype(compute_dtype)
    w = w_ref[...].astype(compute_dtype)

    # (tm, tk) . (tn, tk), contracting K of both -> (tm, tn); no in-kernel transpose.
    prod = jax.lax.dot_general(
        a, w,
        dimension_numbers=(((1,), (1,)), ((), ())),
        preferred_element_type=jnp.float32,
    )

    # First K step writes directly (saves a zero store + accumulator read per output tile).
    @pl.when(k_idx == 0)
    def _():
        acc_ref[...] = prod

    @pl.when(k_idx != 0)
    def _():
        acc_ref[...] += prod

    @pl.when(k_idx == pl.num_programs(2) - 1)
    def _():
        o_ref[...] = (acc_ref[...] + b_ref[...].astype(jnp.float32)).astype(o_ref.dtype)


# --------------------------------------------------------------------------------------
# Helpers
# --------------------------------------------------------------------------------------
def _round_up(x, m):
    return ((x + m - 1) // m) * m


def _kth_smallest_abs_bits(abs_flat_f32, k):
    """Exact k-th smallest (1-indexed) of a non-negative f32 array.

    Uses a radix select on the uint32 bit pattern (monotone in value for non-negative
    IEEE-754 floats): 8 vectorized counting passes of 4 bits each.  O(n) memory-bound
    work -- no sort / top_k (which would be near a full sort for k ~ n/2).
    Tie semantics match torch.kthvalue (returns the exact k-th value).
    """
    bits = jax.lax.bitcast_convert_type(abs_flat_f32, jnp.uint32)
    km1 = jnp.int32(k - 1)
    radix_bits = 4
    digits = jnp.arange(1, 1 << radix_bits, dtype=jnp.uint32)          # (15,)
    prefix = jnp.uint32(0)
    for shift in range(32 - radix_bits, -1, -radix_bits):               # 28, 24, ..., 0
        pivots = prefix + (digits << shift)                             # (15,), lower bits zero
        # counts[d] = #{x : bits(x) < pivots[d]}   (non-decreasing in d)
        counts = jnp.sum((bits[:, None] < pivots[None, :]).astype(jnp.int32), axis=0)
        # largest digit whose pivot still has <= k-1 elements below it
        digit = jnp.sum((counts <= km1).astype(jnp.uint32))
        prefix = prefix + (digit << shift)
    return jax.lax.bitcast_convert_type(prefix, jnp.float32)


def _pick_tm(m, tm_max):
    """Pick tm (multiple of 8) minimizing round_up(M, tm) - M; prefer the largest tile."""
    tm_max = max(8, (tm_max // 8) * 8)
    m8 = _round_up(m, 8)
    if m8 <= tm_max:
        return m8                                  # one M tile -> weight streamed exactly once
    best_tm, best_waste = None, None
    for tm in range(tm_max, max(8, tm_max // 2) - 1, -8):
        waste = _round_up(m, tm) - m
        if best_waste is None or waste < best_waste:
            best_tm, best_waste = tm, waste
    return best_tm


class RSparseParams(NamedTuple):
    weight: jax.Array            # (Np, Kp) padded (and optionally cast) weight
    bias: jax.Array              # (1, Np) padded bias
    n: int
    k: int
    tn: int
    tk: int
    compute_dtype: Any           # None -> use x.dtype


def prepare_rsparse_params(weight, bias, *, compute_dtype: Optional[Any] = None,
                           tn_max=512, tk_max=1024):
    """One-time (static) weight preparation: tile-size choice, padding, optional dtype cast.

    Doing this outside the hot path avoids a full HBM read+write of the weight every forward.
    compute_dtype=jnp.bfloat16 stores the weight in bf16 (half the weight DMA traffic) and
    feeds the MXU in bf16 with f32 accumulation -- an opt-in numerics relaxation.
    """
    N, K = weight.shape
    tn = min(max(128, (tn_max // 128) * 128), _round_up(N, 128))
    tk = min(max(128, (tk_max // 128) * 128), _round_up(K, 128))
    Np = _round_up(N, tn)
    Kp = _round_up(K, tk)
    # Ensure >= 2 j-tiles when possible so v7x's two TensorCores both get work even when the
    # whole M fits a single i-tile (common decode case).
    if Np // tn < 2 and Np >= 256:
        tn_half = ((Np // 2) // 128) * 128
        if tn_half >= 128:
            tn = tn_half
            Np = _round_up(N, tn)

    w = weight if compute_dtype is None else weight.astype(compute_dtype)
    if (Np, Kp) != (N, K):
        w = jnp.pad(w, ((0, Np - N), (0, Kp - K)))

    b = bias if bias is not None else jnp.zeros((N,), weight.dtype)
    b2 = b.reshape(1, N)
    if Np != N:
        b2 = jnp.pad(b2, ((0, 0), (0, Np - N)))

    return RSparseParams(w, b2, N, K, tn, tk, compute_dtype)


# --------------------------------------------------------------------------------------
# Forward
# --------------------------------------------------------------------------------------
def r_sparse_linear(x, params: RSparseParams, sparsity, *, tm_max=512, w_buffers=2):
    """JAX/Pallas equivalent of R_Sparse_Linear.forward.

    x: (B, T, H); params: output of prepare_rsparse_params (weight padded once, offline).
    """
    B, T, H = x.shape
    N, K = params.n, params.k
    assert K == H, f"in_features mismatch: {K} vs {H}"
    out_dtype = x.dtype
    compute_dtype = params.compute_dtype if params.compute_dtype is not None else x.dtype

    # --- threshold: torch.kthvalue(|x|.view(-1), int(numel * sparsity)) ---
    numel = x.size
    kth = int(numel * sparsity)
    if kth < 1:
        # TODO(synk): torch.kthvalue raises for k == 0 (sparsity == 0); treat as "keep all".
        thr_val = jnp.float32(-jnp.inf)
    else:
        thr_val = _kth_smallest_abs_bits(jnp.abs(x).astype(jnp.float32).ravel(), kth)
    thr = jnp.asarray(thr_val, jnp.float32).reshape(1, 1)

    # --- activations: flatten, pick tm, pad ---
    M = B * T
    x2d = x.reshape(M, K)
    tm = _pick_tm(M, tm_max)
    Mp = _round_up(M, tm)
    Np, Kp = params.weight.shape
    tn, tk = params.tn, params.tk
    if (Mp, Kp) != (M, K):
        x2d = jnp.pad(x2d, ((0, Mp - M), (0, Kp - K)))

    grid = (Mp // tm, Np // tn, Kp // tk)

    # --- VMEM budget sized to the actual tile footprint (raise v5e's 16 MiB default scoped
    #     limit when tiles grow; stay well under v7x's 64 MiB physical VMEM) ---
    xb = jnp.dtype(x.dtype).itemsize
    wb = jnp.dtype(params.weight.dtype).itemsize
    ob = jnp.dtype(out_dtype).itemsize
    est = (2 * tm * tk * xb                 # x tile, double-buffered
           + max(2, w_buffers) * tn * tk * wb
           + 2 * tm * tn * ob               # out tile, double-buffered
           + tm * tn * 4                    # f32 accumulator
           + 2 * tn * 4)                    # bias tile
    vmem_limit = int(min(48 * 1024 * 1024, max(2 * est, 24 * 1024 * 1024)))

    if w_buffers == 2:
        w_spec = pl.BlockSpec((tn, tk), lambda i, j, kk: (j, kk))
    else:
        # Deepen weight pipelining if profiling shows exposed DMA (weight-streaming regime).
        w_spec = pl.BlockSpec((tn, tk), lambda i, j, kk: (j, kk),
                              pipeline_mode=pl.Buffered(w_buffers))

    kernel = functools.partial(_rsparse_matmul_kernel, compute_dtype=compute_dtype)

    out2d = pl.pallas_call(
        kernel,
        out_shape=jax.ShapeDtypeStruct((Mp, Np), out_dtype),
        grid=grid,
        in_specs=[
            pl.BlockSpec(memory_space=pltpu.MemorySpace.SMEM),        # threshold (1, 1)
            pl.BlockSpec((tm, tk), lambda i, j, kk: (i, kk)),         # x tile
            w_spec,                                                   # W tile (out, in) layout
            pl.BlockSpec((1, tn), lambda i, j, kk: (0, j)),           # bias tile
        ],
        out_specs=pl.BlockSpec((tm, tn), lambda i, j, kk: (i, j)),
        scratch_shapes=[pltpu.VMEM((tm, tn), jnp.float32)],
        compiler_params=pltpu.CompilerParams(
            dimension_semantics=("parallel", "parallel", "arbitrary"),
            vmem_limit_bytes=vmem_limit),
    )(thr, x2d, params.weight, params.bias)

    return out2d[:M, :N].reshape(B, T, N)


# --------------------------------------------------------------------------------------
# Pure-JAX reference mirroring the PyTorch forward exactly
# --------------------------------------------------------------------------------------
def _reference(x, weight, bias, sparsity):
    numel = x.size
    k = int(numel * sparsity)
    thr = jnp.sort(jnp.abs(x).ravel())[k - 1] if k >= 1 else jnp.float32(-jnp.inf)
    mask = (jnp.abs(x) > thr).astype(x.dtype)
    xs = x * mask
    y = jnp.einsum("bth,nh->btn", xs, weight)
    if bias is not None:
        y = y + bias
    return y


if __name__ == "__main__":
    # Small shapes consistent with the module's forward: (bs, token, hidden)
    B, T, H = 2, 8, 32
    OUT = 32
    SPARSITY = 0.5

    key = jax.random.PRNGKey(0)
    kx, kw, kb = jax.random.split(key, 3)
    x = jax.random.normal(kx, (B, T, H), dtype=jnp.float32)
    weight = jax.random.normal(kw, (OUT, H), dtype=jnp.float32) * (1.0 / jnp.sqrt(H))
    bias = jax.random.normal(kb, (OUT,), dtype=jnp.float32) * 0.01

    # Exact f32 path (weight prepared once, outside the hot path).
    params = prepare_rsparse_params(weight, bias)
    out = jax.block_until_ready(r_sparse_linear(x, params, SPARSITY))
    ref = _reference(x, weight, bias, SPARSITY)
    assert out.shape == (B, T, OUT)
    assert jnp.allclose(out, ref, atol=1e-4, rtol=1e-4)

    # Non-multiple-of-(8,128) shapes exercise the padding path (still exact f32).
    B2, T2, H2, OUT2 = 2, 13, 96, 80
    x2 = jax.random.normal(jax.random.PRNGKey(1), (B2, T2, H2), dtype=jnp.float32)
    w2 = jax.random.normal(jax.random.PRNGKey(2), (OUT2, H2), dtype=jnp.float32) * (1.0 / jnp.sqrt(H2))
    b2 = jax.random.normal(jax.random.PRNGKey(3), (OUT2,), dtype=jnp.float32) * 0.01
    p2 = prepare_rsparse_params(w2, b2)
    out2 = jax.block_until_ready(r_sparse_linear(x2, p2, 0.3))
    ref2 = _reference(x2, w2, b2, 0.3)
    assert out2.shape == (B2, T2, OUT2)
    assert jnp.allclose(out2, ref2, atol=1e-4, rtol=1e-4)

    # Opt-in bf16 MXU path (weight stored in bf16, f32 accumulation kept) -- looser tolerance.
    p_bf16 = prepare_rsparse_params(weight, bias, compute_dtype=jnp.bfloat16)
    out_bf16 = jax.block_until_ready(r_sparse_linear(x, p_bf16, SPARSITY))
    assert jnp.allclose(out_bf16, ref, atol=3e-2, rtol=3e-2)

    print("KERNEL_OK")
</pallas_src>

<mosaic_0001>
module attributes {stable_mosaic.version = 11 : i64} {
  func.func @_rsparse_matmul_kernel(%arg0: i32, %arg1: i32, %arg2: i32, %arg3: memref<1x1xf32, #tpu.memory_space<smem>>, %arg4: memref<16x128xf32, #tpu.memory_space<vmem>>, %arg5: memref<128x128xf32, #tpu.memory_space<vmem>>, %arg6: memref<1x128xf32, #tpu.memory_space<vmem>>, %arg7: memref<16x128xf32, #tpu.memory_space<vmem>>, %arg8: memref<16x128xf32, #tpu.memory_space<vmem>>) attributes {dimension_semantics = [#tpu.dimension_semantics<parallel>, #tpu.dimension_semantics<parallel>, #tpu.dimension_semantics<arbitrary>], iteration_bounds = array<i64: 1, 1, 1>, scalar_prefetch = 0 : i64, scratch_operands = 1 : i64, tpu.core_type = #tpu.core_type<tc>, window_params = [{transform_indices = @transform_0, window_bounds = array<i64: 1, 1>}, {transform_indices = @transform_1, window_bounds = array<i64: 16, 128>}, {transform_indices = @transform_2, window_bounds = array<i64: 128, 128>}, {transform_indices = @transform_3, window_bounds = array<i64: 1, 128>}, {transform_indices = @transform_4, window_bounds = array<i64: 16, 128>}]} {
    %c0 = arith.constant 0 : index
    %c0_0 = arith.constant 0 : index
    %0 = memref.load %arg3[%c0, %c0_0] : memref<1x1xf32, #tpu.memory_space<smem>>
    %c0_1 = arith.constant 0 : index
    %c0_2 = arith.constant 0 : index
    %1 = vector.load %arg4[%c0_1, %c0_2] : memref<16x128xf32, #tpu.memory_space<vmem>>, vector<16x128xf32>
    %2 = math.absf %1 : vector<16x128xf32>
    %3 = vector.broadcast %0 : f32 to vector<16x128xf32>
    %4 = arith.cmpf ogt, %2, %3 : vector<16x128xf32>
    %cst = arith.constant 0.000000e+00 : f32
    %5 = vector.broadcast %cst : f32 to vector<16x128xf32>
    %6 = arith.select %4, %1, %5 : vector<16x128xi1>, vector<16x128xf32>
    %c0_3 = arith.constant 0 : index
    %c0_4 = arith.constant 0 : index
    %7 = vector.load %arg5[%c0_3, %c0_4] : memref<128x128xf32, #tpu.memory_space<vmem>>, vector<128x128xf32>
    %cst_5 = arith.constant dense<0.000000e+00> : vector<16x128xf32>
    %8 = tpu.matmul %6, %7, %cst_5 {dimension_numbers = #tpu.dot_dimension_numbers<[1], [1], [0], [0], [0, 0, 1, 0], [], []>} : vector<16x128xf32>, vector<128x128xf32>, vector<16x128xf32> -> vector<16x128xf32>
    %c0_i32 = arith.constant 0 : i32
    %9 = arith.cmpi eq, %arg2, %c0_i32 : i32
    %10 = arith.extui %9 : i1 to i32
    %c0_i32_6 = arith.constant 0 : i32
    %11 = arith.cmpi ne, %10, %c0_i32_6 : i32
    scf.if %11 {
      %c0_11 = arith.constant 0 : index
      %c0_12 = arith.constant 0 : index
      %18 = vector.load %arg8[%c0_11, %c0_12] : memref<16x128xf32, #tpu.memory_space<vmem>>, vector<16x128xf32>
      tpu.vector_store %arg8[%c0_11, %c0_12], %8 {strides = array<i32>} : memref<16x128xf32, #tpu.memory_space<vmem>>, vector<16x128xf32>,
    } else {
    }
    %c0_i32_7 = arith.constant 0 : i32
    %12 = arith.cmpi ne, %arg2, %c0_i32_7 : i32
    %13 = arith.extui %12 : i1 to i32
    %c0_i32_8 = arith.constant 0 : i32
    %14 = arith.cmpi ne, %13, %c0_i32_8 : i32
    scf.if %14 {
      %c0_11 = arith.constant 0 : index
      %c0_12 = arith.constant 0 : index
      %18 = vector.load %arg8[%c0_11, %c0_12] : memref<16x128xf32, #tpu.memory_space<vmem>>, vector<16x128xf32>
      %19 = arith.addf %18, %8 : vector<16x128xf32>
      %c0_13 = arith.constant 0 : index
      %c0_14 = arith.constant 0 : index
      %20 = vector.load %arg8[%c0_13, %c0_14] : memref<16x128xf32, #tpu.memory_space<vmem>>, vector<16x128xf32>
      tpu.vector_store %arg8[%c0_13, %c0_14], %19 {strides = array<i32>} : memref<16x128xf32, #tpu.memory_space<vmem>>, vector<16x128xf32>,
    } else {
    }
    %c0_i32_9 = arith.constant 0 : i32
    %15 = arith.cmpi eq, %arg2, %c0_i32_9 : i32
    %16 = arith.extui %15 : i1 to i32
    %c0_i32_10 = arith.constant 0 : i32
    %17 = arith.cmpi ne, %16, %c0_i32_10 : i32
    scf.if %17 {
      %c0_11 = arith.constant 0 : index
      %c0_12 = arith.constant 0 : index
      %18 = vector.load %arg8[%c0_11, %c0_12] : memref<16x128xf32, #tpu.memory_space<vmem>>, vector<16x128xf32>
      %c0_13 = arith.constant 0 : index
      %c0_14 = arith.constant 0 : index
      %19 = vector.load %arg6[%c0_13, %c0_14] : memref<1x128xf32, #tpu.memory_space<vmem>>, vector<1x128xf32>
      %20 = vector.broadcast %19 : vector<1x128xf32> to vector<16x128xf32>
      %21 = arith.addf %18, %20 : vector<16x128xf32>
      %c0_15 = arith.constant 0 : index
      %c0_16 = arith.constant 0 : index
      %22 = vector.load %arg7[%c0_15, %c0_16] : memref<16x128xf32, #tpu.memory_space<vmem>>, vector<16x128xf32>
      tpu.vector_store %arg7[%c0_15, %c0_16], %21 {strides = array<i32>} : memref<16x128xf32, #tpu.memory_space<vmem>>, vector<16x128xf32>,
    } else {
    }
    return
  }
  func.func @transform_0(%arg0: i32, %arg1: i32, %arg2: i32) -> (i32, i32) {
    %c0_i32 = arith.constant 0 : i32
    %c0_i32_0 = arith.constant 0 : i32
    %c0_i32_1 = arith.constant 0 : i32
    return %c0_i32, %c0_i32_0 : i32, i32
  }
  func.func @transform_1(%arg0: i32, %arg1: i32, %arg2: i32) -> (i32, i32) {
    %c0_i32 = arith.constant 0 : i32
    return %arg0, %arg2 : i32, i32
  }
  func.func @transform_2(%arg0: i32, %arg1: i32, %arg2: i32) -> (i32, i32) {
    %c0_i32 = arith.constant 0 : i32
    return %arg1, %arg2 : i32, i32
  }
  func.func @transform_3(%arg0: i32, %arg1: i32, %arg2: i32) -> (i32, i32) {
    %c0_i32 = arith.constant 0 : i32
    %c0_i32_0 = arith.constant 0 : i32
    return %c0_i32, %arg1 : i32, i32
  }
  func.func @transform_4(%arg0: i32, %arg1: i32, %arg2: i32) -> (i32, i32) {
    %c0_i32 = arith.constant 0 : i32
    return %arg0, %arg1 : i32, i32
  }
}

</mosaic_0001>

<llo_original>
// kernel: tpu_custom_call.1
$region0: #{tpu_custom_call.1}
  #allocation0 [shape = 'u32[]', space=smem, size = 0x4, offset = 0x4, fixed_abs, tag = 'smem constant byte address 0x4 - core index']
  #allocation1 [shape = 'u32[144,128]{1,0:T(1,128)}', space=vmem, size = 0x12000, scoped, tag = 'internal scratch']
  #allocation2 [shape = 'f32[16,128]{1,0:T(8,128)}', space=vmem, size = 0x2000, scoped, tag = 'scratch operand']
  #allocation3 [shape = 'f32[1,1]{1,0:T(1,128)S(6)}', space=smem, size = 0x200, scoped, tag = 'scoped memory for tpu_custom_call.1']
  %s0 = inlined_call_operand.<no memory space> [shape: f32[1,1], index: 0, kind: input, shape index: {}]
  %s1 = inlined_call_operand.hbm [shape: f32[16,128], index: 1, kind: input, shape index: {}]
  %s2 = inlined_call_operand.hbm [shape: f32[128,128], index: 2, kind: input, shape index: {}]
  %s3 = inlined_call_operand.vmem [shape: f32[1,128], index: 3, kind: input, shape index: {}]
  %s4 = inlined_call_operand.hbm [shape: f32[16,128], index: 4, kind: output, shape index: {}]
  %s5 = sld [smem:[#allocation0]]
  $region46: #{tpu_custom_call.1} parent=0
    _
  %s7 = ssub.s32 1, %s5
  %s8 = scalar_select 0, %s7, %s5
  %9 = sst [smem:[#allocation3]] %s0
  $region1: #{tpu_custom_call.1} parent=0
    #allocation4 [shape = 'u8[8192]{0}', space=vmem, size = 0x2000, scoped, tag = 'input window, operand 1, single buffered']
    #allocation5 [shape = 's32[1]{0}', space=sflag, size = 0x4, scoped, tag = 'scoped memory for tpu_custom_call.1']
    #allocation6 [shape = 's32[1]{0}', space=sflag, size = 0x4, scoped, tag = 'scoped memory for tpu_custom_call.1']
    #allocation7 [shape = 'u8[65536]{0}', space=vmem, size = 0x10000, scoped, tag = 'input window, operand 2, single buffered']
    #allocation8 [shape = 's32[1]{0}', space=sflag, size = 0x4, scoped, tag = 'scoped memory for tpu_custom_call.1']
    #allocation9 [shape = 'u8[8192]{0}', space=vmem, size = 0x2000, scoped, tag = 'output window, operand 0, single buffered']
    %10 = vsyncpa [#allocation5], 0
    %11 = vsyncpa [#allocation8], 0
    %12 = vsyncpa [#allocation6], 0
    // Predicated region
    $region2: #{tpu_custom_call.1} parent=1 // pred_check
      _
    $region3: #{tpu_custom_call.1} parent=1 // pred_check_branch
      %14 = sbr.rel (0) target = $region5
    $region4: #{tpu_custom_call.1} parent=1 // pred_region
      _
    $region5: #{tpu_custom_call.1} parent=1 // pred_fallthru
      _
    // Predicated region
    $region6: #{tpu_custom_call.1} parent=1 // pred_check
      _
    $region7: #{tpu_custom_call.1} parent=1 // pred_check_branch
      %16 = sbr.rel (0) target = $region9
    $region8: #{tpu_custom_call.1} parent=1 // pred_region
      %s18 = ssub.s32 256, 256
      %19 = vsyncadd [#allocation5], %s18
      %s20 = sshll.u32 [#allocation4], 4
      %s21 = int_to_ptr.vmem [resolvable:$true] %s20
      %26 = dma.hbm_to_vmem [thread:$0]  %s1, 256, %s21, [#allocation5], 128, 128, 8
    $region9: #{tpu_custom_call.1} parent=1 // pred_fallthru
      _
    // Predicated region
    $region10: #{tpu_custom_call.1} parent=1 // pred_check
      _
    $region11: #{tpu_custom_call.1} parent=1 // pred_check_branch
      %28 = sbr.rel (0) target = $region13
    $region12: #{tpu_custom_call.1} parent=1 // pred_region
      %s30 = ssub.s32 2048, 2048
      %31 = vsyncadd [#allocation8], %s30
      %s32 = sshll.u32 [#allocation7], 4
      %s33 = int_to_ptr.vmem [resolvable:$true] %s32
      %38 = dma.hbm_to_vmem [thread:$0]  %s2, 2048, %s33, [#allocation8], 128, 128, 8
    $region13: #{tpu_custom_call.1} parent=1 // pred_fallthru
      _
    // Predicated region
    $region14: #{tpu_custom_call.1} parent=1 // pred_check
      _
    $region15: #{tpu_custom_call.1} parent=1 // pred_check_branch
      %40 = sbr.rel (0) target = $region17
    $region16: #{tpu_custom_call.1} parent=1 // pred_region
      _
    $region17: #{tpu_custom_call.1} parent=1 // pred_fallthru
      _
    // Predicated region
    $region18: #{tpu_custom_call.1} parent=1 // pred_check
      _
    $region19: #{tpu_custom_call.1} parent=1 // pred_check_branch
      %42 = sbr.rel (0) target = $region21
    $region20: #{tpu_custom_call.1} parent=1 // pred_region
      %43 = dma.done [#allocation5], 256
    $region21: #{tpu_custom_call.1} parent=1 // pred_fallthru
      _
    // Predicated region
    $region22: #{tpu_custom_call.1} parent=1 // pred_check
      _
    $region23: #{tpu_custom_call.1} parent=1 // pred_check_branch
      %45 = sbr.rel (0) target = $region25
    $region24: #{tpu_custom_call.1} parent=1 // pred_region
      %46 = dma.done [#allocation8], 2048
    $region25: #{tpu_custom_call.1} parent=1 // pred_fallthru
      _
    %s47 = sld [smem:[#allocation3]]
    %v48 = vld [vmem:[#allocation4] sm:$0xff]
    %v49 = vld [vmem:[#allocation4 + $0x8] sm:$0xff]
    %v50 = vand.u32 2147483647, %v48
    %v51 = vand.u32 2147483647, %v49
    %v52 = vstv %s47
    %vm53 = vcmp.gt.f32.partialorder %v50, %v52
    %vm54 = vcmp.gt.f32.partialorder %v51, %v52
    %v55 = vsel %vm53, %v48, 0.0
    %v56 = vsel %vm54, %v49, 0.0
    %v57 = vld [vmem:[#allocation7] sm:$0xff]
    %v58 = vld [vmem:[#allocation7 + $0x8] sm:$0xff]
    %v59 = vld [vmem:[#allocation7 + $0x10] sm:$0xff]
    %v60 = vld [vmem:[#allocation7 + $0x18] sm:$0xff]
    %v61 = vld [vmem:[#allocation7 + $0x20] sm:$0xff]
    %v62 = vld [vmem:[#allocation7 + $0x28] sm:$0xff]
    %v63 = vld [vmem:[#allocation7 + $0x30] sm:$0xff]
    %v64 = vld [vmem:[#allocation7 + $0x38] sm:$0xff]
    %v65 = vld [vmem:[#allocation7 + $0x40] sm:$0xff]
    %v66 = vld [vmem:[#allocation7 + $0x48] sm:$0xff]
    %v67 = vld [vmem:[#allocation7 + $0x50] sm:$0xff]
    %v68 = vld [vmem:[#allocation7 + $0x58] sm:$0xff]
    %v69 = vld [vmem:[#allocation7 + $0x60] sm:$0xff]
    %v70 = vld [vmem:[#allocation7 + $0x68] sm:$0xff]
    %v71 = vld [vmem:[#allocation7 + $0x70] sm:$0xff]
    %v72 = vld [vmem:[#allocation7 + $0x78] sm:$0xff]
    %73 = vmatprep.subr.mxu0 0.0
    %74 = vmatpush1.xpose.msra.mxu0 %v57
    %75 = vmatprep.subr.mxu0 0.0
    %76 = vmatpush1.xpose.msra.mxu0 %v58
    %77 = vmatprep.subr.mxu0 0.0
    %78 = vmatpush1.xpose.msra.mxu0 %v59
    %79 = vmatprep.subr.mxu0 0.0
    %80 = vmatpush1.xpose.msra.mxu0 %v60
    %81 = vmatprep.subr.mxu0 0.0
    %82 = vmatpush1.xpose.msra.mxu0 %v61
    %83 = vmatprep.subr.mxu0 0.0
    %84 = vmatpush1.xpose.msra.mxu0 %v62
    %85 = vmatprep.subr.mxu0 0.0
    %86 = vmatpush1.xpose.msra.mxu0 %v63
    %87 = vmatprep.subr.mxu0 0.0
    %88 = vmatpush1.xpose.msra.mxu0 %v64
    %89 = vmatprep.subr.mxu0 0.0
    %90 = vmatpush1.xpose.msra.mxu0 %v65
    %91 = vmatprep.subr.mxu0 0.0
    %92 = vmatpush1.xpose.msra.mxu0 %v66
    %93 = vmatprep.subr.mxu0 0.0
    %94 = vmatpush1.xpose.msra.mxu0 %v67
    %95 = vmatprep.subr.mxu0 0.0
    %96 = vmatpush1.xpose.msra.mxu0 %v68
    %97 = vmatprep.subr.mxu0 0.0
    %98 = vmatpush1.xpose.msra.mxu0 %v69
    %99 = vmatprep.subr.mxu0 0.0
    %100 = vmatpush1.xpose.msra.mxu0 %v70
    %101 = vmatprep.subr.mxu0 0.0
    %102 = vmatpush1.xpose.msra.mxu0 %v71
    %103 = vmatprep.subr.mxu0 0.0
    %104 = vmatpush1.xpose.msra.mxu0 %v72
    %105 = vmatprep.subr.mxu0 0.0
    %106 = vmatpush1.xpose.msra.mxu0 0.0
    %107 = vmatprep.subr.mxu0 0.0
    %108 = vmatpush1.xpose.msra.mxu0 0.0
    %109 = vmatprep.subr.mxu0 0.0
    %110 = vmatpush1.xpose.msra.mxu0 0.0
    %111 = vmatprep.subr.mxu0 0.0
    %112 = vmatpush1.xpose.msra.mxu0 0.0
    %113 = vmatprep.subr.mxu0 0.0
    %114 = vmatpush1.xpose.msra.mxu0 0.0
    %115 = vmatprep.subr.mxu0 0.0
    %116 = vmatpush1.xpose.msra.mxu0 0.0
    %117 = vmatprep.subr.mxu0 0.0
    %118 = vmatpush1.xpose.msra.mxu0 0.0
    %119 = vmatprep.subr.mxu0 0.0
    %120 = vmatpush1.xpose.msra.mxu0 0.0
    %121 = vmatprep.subr.mxu0 0.0
    %122 = vmatpush1.xpose.msra.mxu0 0.0
    %123 = vmatprep.subr.mxu0 0.0
    %124 = vmatpush1.xpose.msra.mxu0 0.0
    %125 = vmatprep.subr.mxu0 0.0
    %126 = vmatpush1.xpose.msra.mxu0 0.0
    %127 = vmatprep.subr.mxu0 0.0
    %128 = vmatpush1.xpose.msra.mxu0 0.0
    %129 = vmatprep.subr.mxu0 0.0
    %130 = vmatpush1.xpose.msra.mxu0 0.0
    %131 = vmatprep.subr.mxu0 0.0
    %132 = vmatpush1.xpose.msra.mxu0 0.0
    %133 = vmatprep.subr.mxu0 0.0
    %134 = vmatpush1.xpose.msra.mxu0 0.0
    %135 = vmatprep.subr.mxu0 0.0
    %136 = vmatpush1.xpose.msra.mxu0 0.0
    %137 = vmatprep.mubr.f32.mxu0 0.0
    %138 = vmatmul.mubr.f32.gmra.mrb[0].mxu0 %v55
    %v139 = vpop.f32.mrb[0].mxu0
    %v140 = vadd.f32 0.0, %v139
    %v141 = vpop.f32.mrb[0].mxu0
    %142 = vmatprep.mubr.f32.mxu0 0.0
    %143 = vmatmul.mubr.f32.gmra.mrb[0].mxu0 %v56
    %v144 = vpop.f32.mrb[0].mxu0
    %v145 = vadd.f32 0.0, %v144
    %v146 = vpop.f32.mrb[0].mxu0
    %147 = vdwg.mxu0
    %p148 = scmp.eq.s32.totalorder 0, 0
    // Predicated region
    $region26: #{tpu_custom_call.1} parent=1 // pred_check
      %p149 = pneg %p148
    $region27: #{tpu_custom_call.1} parent=1 // pred_check_branch
      %151 = sbr.rel (%p149) target = $region29
    $region28: #{tpu_custom_call.1} parent=1 // pred_region
      %152 = vst [vmem:[#allocation2] sm:$0xff] %v140
      %153 = vst [vmem:[#allocation2 + $0x8] sm:$0xff] %v145
    $region29: #{tpu_custom_call.1} parent=1 // pred_fallthru
      _
    %p154 = scmp.ne.s32.totalorder 0, 0
    // Predicated region
    $region30: #{tpu_custom_call.1} parent=1 // pred_check
      %p155 = pneg %p154
    $region31: #{tpu_custom_call.1} parent=1 // pred_check_branch
      %157 = sbr.rel (%p155) target = $region33
    $region32: #{tpu_custom_call.1} parent=1 // pred_region
      %v158 = vld [vmem:[#allocation2] sm:$0xff]
      %v159 = vld [vmem:[#allocation2 + $0x8] sm:$0xff]
      %v160 = vadd.f32 %v158, %v140
      %v161 = vadd.f32 %v159, %v145
      %162 = vst [vmem:[#allocation2] sm:$0xff] %v160
      %163 = vst [vmem:[#allocation2 + $0x8] sm:$0xff] %v161
    $region33: #{tpu_custom_call.1} parent=1 // pred_fallthru
      _
    // Predicated region
    $region34: #{tpu_custom_call.1} parent=1 // pred_check
      %p164 = pneg %p148
    $region35: #{tpu_custom_call.1} parent=1 // pred_check_branch
      %166 = sbr.rel (%p164) target = $region37
    $region36: #{tpu_custom_call.1} parent=1 // pred_region
      %v167 = vld [vmem:[#allocation2] sm:$0xff]
      %v168 = vld [vmem:[#allocation2 + $0x8] sm:$0xff]
      %v169 = vld [vmem:[%s3] sm:$0x1]
      %v171 = vlaneseq
      %v172 = vshrl.u32 %v171, 7
      %v173 = vsub.s32 0, %v172
      %v174 = vrot.slane %v169, %v173
      %v176 = vadd.f32 %v167, %v174
      %v177 = vadd.f32 %v168, %v174
      %178 = vst [vmem:[#allocation9] sm:$0xff] %v176
      %179 = vst [vmem:[#allocation9 + $0x8] sm:$0xff] %v177
    $region37: #{tpu_custom_call.1} parent=1 // pred_fallthru
      _
    // Predicated region
    $region38: #{tpu_custom_call.1} parent=1 // pred_check
      _
    $region39: #{tpu_custom_call.1} parent=1 // pred_check_branch
      %181 = sbr.rel (0) target = $region41
    $region40: #{tpu_custom_call.1} parent=1 // pred_region
      %s183 = ssub.s32 256, 256
      %184 = vsyncadd [#allocation6], %s183
      %s185 = sshll.u32 [#allocation9], 4
      %s186 = int_to_ptr.vmem [resolvable:$true] %s185
      %191 = dma.vmem_to_hbm [thread:$0]  %s186, 256, %s4, [#allocation6], 128, 128, 8
    $region41: #{tpu_custom_call.1} parent=1 // pred_fallthru
      _
    // Predicated region
    $region42: #{tpu_custom_call.1} parent=1 // pred_check
      _
    $region43: #{tpu_custom_call.1} parent=1 // pred_check_branch
      %193 = sbr.rel (0) target = $region45
    $region44: #{tpu_custom_call.1} parent=1 // pred_region
      %194 = dma.done [#allocation6], 256
    $region45: #{tpu_custom_call.1} parent=1 // pred_fallthru
      _
    %195 = vsyncpa [#allocation5], 1
    %196 = vsyncpa [#allocation8], 1
    %197 = vsyncpa [#allocation6], 1

</llo_original>
